<compile_context>
chip_gen: v7x
topology: tpu7x:2x2x1
jax: 0.10.0
libtpu: 0.0.40
codegen_flags: <defaults>
</compile_context>

<pallas_src>
import functools

import jax
import jax.numpy as jnp
from jax.experimental import pallas as pl
from jax.experimental.pallas import tpu as pltpu

LANE = 128
SUBLANE_BF16 = 16  # native bf16 sublane tile is (16, 128)


def _round_up(x, m):
    return ((x + m - 1) // m) * m


def _mlp_kernel(x_ref, w1_ref, b1_ref, w2_ref, b2_ref, o_ref):
    # x_ref : [TB, din_p]     bf16
    # w1_ref: [din_p, hid_p]  bf16    b1_ref: [1, hid_p] f32
    # w2_ref: [hid_p, out_p]  bf16    b2_ref: [1, out_p] f32
    # o_ref : [TB, out_p]     f32/bf16 (lane-dense: out_p % 128 == 0)
    h = jnp.dot(x_ref[...], w1_ref[...], preferred_element_type=jnp.float32)
    h = jnp.maximum(h + b1_ref[...], 0.0)                    # bias + ReLU in f32
    out = jnp.dot(h.astype(jnp.bfloat16), w2_ref[...],
                  preferred_element_type=jnp.float32)
    o_ref[...] = (out + b2_ref[...]).astype(o_ref.dtype)


def _choose_batch_tiling(B, F):
    """Return (Bp, tb): padded batch and batch tile (tb | Bp, tb % 16 == 0)."""
    if B <= 512:
        if F == 1 and B > SUBLANE_BF16:
            # Guarantee >= 2 batch tiles so both v7x TensorCores get work.
            Bp = _round_up(B, 2 * SUBLANE_BF16)
            tb = Bp // 2
        else:
            Bp = _round_up(B, SUBLANE_BF16)
            tb = Bp
    else:
        # Large batch: big tiles (multiples of 256 fill the v6e/v7x MXU M side)
        Bp = _round_up(B, 256)
        tb = 256
        for cand in (1024, 512):
            if Bp % cand == 0:
                tb = cand
                break
    return Bp, tb


@functools.partial(jax.jit, static_argnames=("tb", "out_dtype"))
def _stacked_mlp_pallas(x, w1, b1, w2, b2, *, tb, out_dtype=jnp.float32):
    """x:[F,Bp,din_p] bf16, w1:[F,din_p,hid_p] bf16, b1:[F,1,hid_p] f32,
    w2:[F,hid_p,out_p] bf16, b2:[F,1,out_p] f32  ->  [F,Bp,out_p] out_dtype."""
    F, Bp, din_p = x.shape
    hid_p = w1.shape[2]
    out_p = w2.shape[2]
    nb = Bp // tb

    # Weights/biases are reused by every batch tile of a feature; only
    # double-buffer them while they are small.  Once they are big, a single
    # buffer halves their VMEM footprint (key on v7x's 64 MiB VMEM).
    per_feat_weight_bytes = (din_p * hid_p + hid_p * out_p) * 2
    resident_kwargs = {}
    if per_feat_weight_bytes > (2 << 20) and hasattr(pl, "Buffered"):
        resident_kwargs = dict(pipeline_mode=pl.Buffered(1))

    def wspec(shape, index_map):
        try:
            return pl.BlockSpec(shape, index_map, **resident_kwargs)
        except TypeError:  # very old jax without pipeline_mode kwarg
            return pl.BlockSpec(shape, index_map)

    out_itemsize = jnp.dtype(out_dtype).itemsize
    flops = 2 * F * Bp * (din_p * hid_p + hid_p * out_p)
    bytes_accessed = (x.size * 2 + w1.size * 2 + w2.size * 2
                      + b1.size * 4 + b2.size * 4
                      + F * Bp * out_p * out_itemsize)
    cost = pl.CostEstimate(flops=flops, transcendentals=0,
                           bytes_accessed=bytes_accessed)

    # Per-step VMEM footprint estimate; raise the scoped limit only if needed
    # and keep headroom below v7x's 64 MiB physical VMEM.
    buf_w = 1 if resident_kwargs else 2
    vmem_need = (
        buf_w * per_feat_weight_bytes                 # bf16 weights
        + buf_w * (hid_p + out_p) * 4                 # f32 biases
        + 2 * tb * din_p * 2                          # x tiles (bf16, 2 bufs)
        + 2 * tb * out_p * out_itemsize               # out tiles (2 bufs)
        + tb * hid_p * (4 + 2)                        # h in f32 + bf16 copy
    )
    vmem_limit = None
    if vmem_need > (24 << 20):
        vmem_limit = min(int(vmem_need * 3 // 2), 48 << 20)
        # TODO(synk): if hid_p is so large that even 48 MiB is not enough,
        # add a third "arbitrary" grid axis tiling hid_p with a VMEM f32
        # accumulator instead of raising the limit.

    return pl.pallas_call(
        _mlp_kernel,
        out_shape=jax.ShapeDtypeStruct((F, Bp, out_p), out_dtype),
        grid=(F, nb),
        in_specs=[
            # feature axis squeezed (block size None) out of every kernel ref
            pl.BlockSpec((None, tb, din_p), lambda f, b: (f, b, 0)),
            wspec((None, din_p, hid_p), lambda f, b: (f, 0, 0)),
            wspec((None, 1, hid_p), lambda f, b: (f, 0, 0)),
            wspec((None, hid_p, out_p), lambda f, b: (f, 0, 0)),
            wspec((None, 1, out_p), lambda f, b: (f, 0, 0)),
        ],
        out_specs=pl.BlockSpec((None, tb, out_p), lambda f, b: (f, b, 0)),
        compiler_params=pltpu.CompilerParams(
            dimension_semantics=("parallel", "parallel"),
            vmem_limit_bytes=vmem_limit),
        cost_estimate=cost,
    )(x, w1, b1, w2, b2)


def _prep_stacked_params(params_list, din_p, hid_p, out_p):
    """Zero-pad each feature's (w1,b1,w2,b2) to shared padded shapes, stack
    along a leading feature axis, and cast the weights to bf16."""
    w1s, b1s, w2s, b2s = [], [], [], []
    for (w1, b1, w2, b2) in params_list:
        d_in, d_hid = w1.shape
        d_out = w2.shape[1]
        w1s.append(jnp.zeros((din_p, hid_p), jnp.float32).at[:d_in, :d_hid].set(w1))
        b1s.append(jnp.zeros((1, hid_p), jnp.float32).at[0, :d_hid].set(b1.reshape(-1)))
        w2s.append(jnp.zeros((hid_p, out_p), jnp.float32).at[:d_hid, :d_out].set(w2))
        b2s.append(jnp.zeros((1, out_p), jnp.float32).at[0, :d_out].set(b2.reshape(-1)))
    return (jnp.stack(w1s).astype(jnp.bfloat16), jnp.stack(b1s),
            jnp.stack(w2s).astype(jnp.bfloat16), jnp.stack(b2s))


def sep_mlp_forward(x, params_list, out_dtype=jnp.float32):
    """x: [B, F, d_in]; params_list[i] = (w1, b1, w2, b2) for feature i.
    All F two-layer MLPs are evaluated in ONE fused, gridded pallas_call.
    Returns a list of [B, d_out_i] arrays (out_dtype, default f32)."""
    B, F, d_in = x.shape
    assert len(params_list) == F
    d_hid = max(p[0].shape[1] for p in params_list)
    out_dims = [p[2].shape[1] for p in params_list]

    din_p = _round_up(d_in, SUBLANE_BF16)     # contraction dim: sublane-align only
    hid_p = _round_up(d_hid, LANE)            # lane-aligned (MXU N / K)
    out_p = _round_up(max(out_dims), LANE)    # lane-dense output stores
    Bp, tb = _choose_batch_tiling(B, F)

    # Cast to bf16 BEFORE transpose/pad so no padded f32 temp is materialized.
    xs = x.astype(jnp.bfloat16)
    xs = jnp.swapaxes(xs, 0, 1)                                  # [F, B, d_in]
    xs = jnp.pad(xs, ((0, 0), (0, Bp - B), (0, din_p - d_in)))   # [F, Bp, din_p]
    w1s, b1s, w2s, b2s = _prep_stacked_params(params_list, din_p, hid_p, out_p)

    out = _stacked_mlp_pallas(xs, w1s, b1s, w2s, b2s, tb=tb,
                              out_dtype=out_dtype)               # [F, Bp, out_p]
    return [out[i, :B, :out_dims[i]] for i in range(F)]


def simple_mlp_forward(x, params, out_dtype=jnp.float32):
    """Forward of the PyTorch `simple_MLP` module: Linear -> ReLU -> Linear."""
    if x.ndim == 1:
        # mirror torch's  x = x.view(x.size(0), -1)  for 1-D inputs
        x = x.reshape(x.shape[0], -1)
    return sep_mlp_forward(x[:, None, :], [params], out_dtype=out_dtype)[0]


def init_simple_mlp_params(key, dims):
    """dims = [d_in, d_hid, d_out].  Weights stored [in, out] (transposed
    w.r.t. torch's nn.Linear [out, in]); init mirrors nn.Linear bounds."""
    d_in, d_hid, d_out = dims
    k1, k2, k3, k4 = jax.random.split(key, 4)
    bound1 = 1.0 / (d_in ** 0.5)
    bound2 = 1.0 / (d_hid ** 0.5)
    w1 = jax.random.uniform(k1, (d_in, d_hid), jnp.float32, -bound1, bound1)
    b1 = jax.random.uniform(k2, (d_hid,), jnp.float32, -bound1, bound1)
    w2 = jax.random.uniform(k3, (d_hid, d_out), jnp.float32, -bound2, bound2)
    b2 = jax.random.uniform(k4, (d_out,), jnp.float32, -bound2, bound2)
    return w1, b1, w2, b2


def simple_mlp_reference(x, params):
    """Pure-JAX reference mirroring the kernel's numerics (bf16 operands,
    f32 accumulation, f32 bias/ReLU) for a tight correctness check."""
    if x.ndim == 1:
        x = x.reshape(x.shape[0], -1)
    w1, b1, w2, b2 = params
    r = lambda a: a.astype(jnp.bfloat16).astype(jnp.float32)
    h = jnp.maximum(
        jnp.dot(r(x), r(w1), preferred_element_type=jnp.float32) + b1.reshape(1, -1),
        0.0)
    return (jnp.dot(r(h), r(w2), preferred_element_type=jnp.float32)
            + b2.reshape(1, -1))


if __name__ == "__main__":
    key = jax.random.PRNGKey(0)
    kx, kp, kxf, ksf, kx2, kp2 = jax.random.split(key, 6)

    # --- plain simple_MLP: dims = [d_in, 5*d_in, d_out] ---
    B, d_in, d_out = 8, 32, 11
    dims = [d_in, 5 * d_in, d_out]          # hidden = 160 (padded to 256 inside)
    params = init_simple_mlp_params(kp, dims)
    x = jax.random.normal(kx, (B, d_in), jnp.float32)

    y = jax.block_until_ready(simple_mlp_forward(x, params))
    y_ref = simple_mlp_reference(x, params)
    assert y.shape == (B, d_out), (y.shape, (B, d_out))
    assert jnp.allclose(y, y_ref, atol=1e-3, rtol=1e-3), "simple_MLP mismatch"

    # --- fused multi-feature usage (sep_MLP stacks simple_MLPs): one launch ---
    categories = [7, 5, 11]
    feat_params = []
    k = ksf
    for c in categories:
        k, kk = jax.random.split(k)
        feat_params.append(init_simple_mlp_params(kk, [d_in, 5 * d_in, c]))
    xf = jax.random.normal(kxf, (B, len(categories), d_in), jnp.float32)

    ys = [jax.block_until_ready(a) for a in sep_mlp_forward(xf, feat_params)]
    for i, c in enumerate(categories):
        assert ys[i].shape == (B, c), (ys[i].shape, (B, c))
        yr = simple_mlp_reference(xf[:, i, :], feat_params[i])
        assert jnp.allclose(ys[i], yr, atol=1e-3, rtol=1e-3), "fused sep mismatch"

    # --- multi-tile path (F == 1, batch split into 2 tiles; unaligned d_in) ---
    B2, d_in2, d_out2 = 48, 20, 3
    params2 = init_simple_mlp_params(kp2, [d_in2, 5 * d_in2, d_out2])
    x2 = jax.random.normal(kx2, (B2, d_in2), jnp.float32)
    y2 = jax.block_until_ready(simple_mlp_forward(x2, params2))
    y2_ref = simple_mlp_reference(x2, params2)
    assert y2.shape == (B2, d_out2), (y2.shape, (B2, d_out2))
    assert jnp.allclose(y2, y2_ref, atol=1e-3, rtol=1e-3), "multi-tile mismatch"

    print("KERNEL_OK")
</pallas_src>

<mosaic_0001>
module attributes {stable_mosaic.version = 11 : i64} {
  func.func @_mlp_kernel(%arg0: i32, %arg1: i32, %arg2: memref<1x16x32xbf16, #tpu.memory_space<vmem>>, %arg3: memref<1x32x256xbf16, #tpu.memory_space<vmem>>, %arg4: memref<1x1x256xf32, #tpu.memory_space<vmem>>, %arg5: memref<1x256x128xbf16, #tpu.memory_space<vmem>>, %arg6: memref<1x1x128xf32, #tpu.memory_space<vmem>>, %arg7: memref<1x16x128xf32, #tpu.memory_space<vmem>>) attributes {dimension_semantics = [#tpu.dimension_semantics<parallel>, #tpu.dimension_semantics<parallel>], iteration_bounds = array<i64: 1, 1>, scalar_prefetch = 0 : i64, scratch_operands = 0 : i64, tpu.core_type = #tpu.core_type<tc>, window_params = [{transform_indices = @transform_0, window_bounds = array<i64: 1, 16, 32>}, {transform_indices = @transform_1, window_bounds = array<i64: 1, 32, 256>}, {transform_indices = @transform_2, window_bounds = array<i64: 1, 1, 256>}, {transform_indices = @transform_3, window_bounds = array<i64: 1, 256, 128>}, {transform_indices = @transform_4, window_bounds = array<i64: 1, 1, 128>}, {transform_indices = @transform_5, window_bounds = array<i64: 1, 16, 128>}]} {
    %c0 = arith.constant 0 : index
    %c0_0 = arith.constant 0 : index
    %c0_1 = arith.constant 0 : index
    %0 = vector.load %arg2[%c0, %c0_0, %c0_1] : memref<1x16x32xbf16, #tpu.memory_space<vmem>>, vector<1x16x32xbf16>
    %1 = vector.shape_cast %0 : vector<1x16x32xbf16> to vector<16x32xbf16>
    %c0_2 = arith.constant 0 : index
    %c0_3 = arith.constant 0 : index
    %c0_4 = arith.constant 0 : index
    %2 = vector.load %arg3[%c0_2, %c0_3, %c0_4] : memref<1x32x256xbf16, #tpu.memory_space<vmem>>, vector<1x32x256xbf16>
    %3 = vector.shape_cast %2 : vector<1x32x256xbf16> to vector<32x256xbf16>
    %cst = arith.constant dense<0.000000e+00> : vector<16x256xf32>
    %4 = tpu.matmul %1, %3, %cst {dimension_numbers = #tpu.dot_dimension_numbers<[1], [0], [0], [1], [0, 0, 1, 1], [], []>} : vector<16x32xbf16>, vector<32x256xbf16>, vector<16x256xf32> -> vector<16x256xf32>
    %c0_5 = arith.constant 0 : index
    %c0_6 = arith.constant 0 : index
    %c0_7 = arith.constant 0 : index
    %5 = vector.load %arg4[%c0_5, %c0_6, %c0_7] : memref<1x1x256xf32, #tpu.memory_space<vmem>>, vector<1x1x256xf32>
    %6 = vector.shape_cast %5 : vector<1x1x256xf32> to vector<1x256xf32>
    %7 = vector.broadcast %6 : vector<1x256xf32> to vector<16x256xf32>
    %8 = arith.addf %4, %7 : vector<16x256xf32>
    %cst_8 = arith.constant 0.000000e+00 : f32
    %9 = vector.broadcast %cst_8 : f32 to vector<16x256xf32>
    %10 = arith.maximumf %8, %9 : vector<16x256xf32>
    %11 = arith.truncf %10 : vector<16x256xf32> to vector<16x256xbf16>
    %c0_9 = arith.constant 0 : index
    %c0_10 = arith.constant 0 : index
    %c0_11 = arith.constant 0 : index
    %12 = vector.load %arg5[%c0_9, %c0_10, %c0_11] : memref<1x256x128xbf16, #tpu.memory_space<vmem>>, vector<1x256x128xbf16>
    %13 = vector.shape_cast %12 : vector<1x256x128xbf16> to vector<256x128xbf16>
    %cst_12 = arith.constant dense<0.000000e+00> : vector<16x128xf32>
    %14 = tpu.matmul %11, %13, %cst_12 {dimension_numbers = #tpu.dot_dimension_numbers<[1], [0], [0], [1], [0, 0, 1, 1], [], []>} : vector<16x256xbf16>, vector<256x128xbf16>, vector<16x128xf32> -> vector<16x128xf32>
    %c0_13 = arith.constant 0 : index
    %c0_14 = arith.constant 0 : index
    %c0_15 = arith.constant 0 : index
    %15 = vector.load %arg6[%c0_13, %c0_14, %c0_15] : memref<1x1x128xf32, #tpu.memory_space<vmem>>, vector<1x1x128xf32>
    %16 = vector.shape_cast %15 : vector<1x1x128xf32> to vector<1x128xf32>
    %17 = vector.broadcast %16 : vector<1x128xf32> to vector<16x128xf32>
    %18 = arith.addf %14, %17 : vector<16x128xf32>
    %c0_16 = arith.constant 0 : index
    %c0_17 = arith.constant 0 : index
    %c0_18 = arith.constant 0 : index
    %19 = vector.load %arg7[%c0_16, %c0_17, %c0_18] : memref<1x16x128xf32, #tpu.memory_space<vmem>>, vector<1x16x128xf32>
    %20 = vector.shape_cast %19 : vector<1x16x128xf32> to vector<16x128xf32>
    %21 = vector.shape_cast %18 : vector<16x128xf32> to vector<1x16x128xf32>
    tpu.vector_store %arg7[%c0_16, %c0_17, %c0_18], %21 {strides = array<i32>} : memref<1x16x128xf32, #tpu.memory_space<vmem>>, vector<1x16x128xf32>,
    return
  }
  func.func @transform_0(%arg0: i32, %arg1: i32) -> (i32, i32, i32) {
    %c0_i32 = arith.constant 0 : i32
    %c0_i32_0 = arith.constant 0 : i32
    return %arg0, %arg1, %c0_i32 : i32, i32, i32
  }
  func.func @transform_1(%arg0: i32, %arg1: i32) -> (i32, i32, i32) {
    %c0_i32 = arith.constant 0 : i32
    %c0_i32_0 = arith.constant 0 : i32
    %c0_i32_1 = arith.constant 0 : i32
    return %arg0, %c0_i32, %c0_i32_0 : i32, i32, i32
  }
  func.func @transform_2(%arg0: i32, %arg1: i32) -> (i32, i32, i32) {
    %c0_i32 = arith.constant 0 : i32
    %c0_i32_0 = arith.constant 0 : i32
    %c0_i32_1 = arith.constant 0 : i32
    return %arg0, %c0_i32, %c0_i32_0 : i32, i32, i32
  }
  func.func @transform_3(%arg0: i32, %arg1: i32) -> (i32, i32, i32) {
    %c0_i32 = arith.constant 0 : i32
    %c0_i32_0 = arith.constant 0 : i32
    %c0_i32_1 = arith.constant 0 : i32
    return %arg0, %c0_i32, %c0_i32_0 : i32, i32, i32
  }
  func.func @transform_4(%arg0: i32, %arg1: i32) -> (i32, i32, i32) {
    %c0_i32 = arith.constant 0 : i32
    %c0_i32_0 = arith.constant 0 : i32
    %c0_i32_1 = arith.constant 0 : i32
    return %arg0, %c0_i32, %c0_i32_0 : i32, i32, i32
  }
  func.func @transform_5(%arg0: i32, %arg1: i32) -> (i32, i32, i32) {
    %c0_i32 = arith.constant 0 : i32
    %c0_i32_0 = arith.constant 0 : i32
    return %arg0, %arg1, %c0_i32 : i32, i32, i32
  }
}

</mosaic_0001>

<llo_original>
// kernel: _stacked_mlp_pallas.1
$region0: #{_stacked_mlp_pallas.1}
  #allocation0 [shape = 'u32[]', space=smem, size = 0x4, offset = 0x4, fixed_abs, tag = 'smem constant byte address 0x4 - core index']
  #allocation1 [shape = 'u32[144,128]{1,0:T(1,128)}', space=vmem, size = 0x12000, scoped, tag = 'internal scratch']
  %s0 = inlined_call_operand.hbm [shape: bf16[1,16,32], index: 0, kind: input, shape index: {}]
  %s1 = inlined_call_operand.hbm [shape: bf16[1,32,256], index: 1, kind: input, shape index: {}]
  %s2 = inlined_call_operand.vmem [shape: f32[1,1,256], index: 2, kind: input, shape index: {}]
  %s3 = inlined_call_operand.hbm [shape: bf16[1,256,128], index: 3, kind: input, shape index: {}]
  %s4 = inlined_call_operand.vmem [shape: f32[1,1,128], index: 4, kind: input, shape index: {}]
  %s5 = inlined_call_operand.hbm [shape: f32[1,16,128], index: 5, kind: output, shape index: {}]
  %s6 = sld [smem:[#allocation0]]
  $region42: #{_stacked_mlp_pallas.1} parent=0
    _
  %s8 = ssub.s32 1, %s6
  %s9 = scalar_select 0, %s8, %s6
  $region1: #{_stacked_mlp_pallas.1} parent=0
    #allocation2 [shape = 'u8[4096]{0}', space=vmem, size = 0x1000, scoped, tag = 'input window, operand 0, single buffered']
    #allocation3 [shape = 's32[1]{0}', space=sflag, size = 0x4, scoped, tag = 'scoped memory for _stacked_mlp_pallas.1']
    #allocation4 [shape = 's32[1]{0}', space=sflag, size = 0x4, scoped, tag = 'scoped memory for _stacked_mlp_pallas.1']
    #allocation5 [shape = 'u8[16384]{0}', space=vmem, size = 0x4000, scoped, tag = 'input window, operand 1, single buffered']
    #allocation6 [shape = 's32[1]{0}', space=sflag, size = 0x4, scoped, tag = 'scoped memory for _stacked_mlp_pallas.1']
    #allocation7 [shape = 'u8[65536]{0}', space=vmem, size = 0x10000, scoped, tag = 'input window, operand 3, single buffered']
    #allocation8 [shape = 'u8[8192]{0}', space=vmem, size = 0x2000, scoped, tag = 'output window, operand 0, single buffered']
    %10 = vsyncpa [#allocation3], 0
    %11 = vsyncpa [#allocation6], 0
    %12 = vsyncpa [#allocation4], 0
    // Predicated region
    $region2: #{_stacked_mlp_pallas.1} parent=1 // pred_check
      _
    $region3: #{_stacked_mlp_pallas.1} parent=1 // pred_check_branch
      %14 = sbr.rel (0) target = $region5
    $region4: #{_stacked_mlp_pallas.1} parent=1 // pred_region
      %s16 = ssub.s32 128, 128
      %17 = vsyncadd [#allocation3], %s16
      %s18 = sshll.u32 [#allocation2], 4
      %s19 = int_to_ptr.vmem [resolvable:$true] %s18
      %24 = dma.hbm_to_vmem [thread:$0]  %s0, 128, %s19, [#allocation3], 64, 64, 4
    $region5: #{_stacked_mlp_pallas.1} parent=1 // pred_fallthru
      _
    // Predicated region
    $region6: #{_stacked_mlp_pallas.1} parent=1 // pred_check
      _
    $region7: #{_stacked_mlp_pallas.1} parent=1 // pred_check_branch
      %26 = sbr.rel (0) target = $region9
    $region8: #{_stacked_mlp_pallas.1} parent=1 // pred_region
      %s28 = ssub.s32 512, 512
      %29 = vsyncadd [#allocation6], %s28
      %s30 = sshll.u32 [#allocation5], 4
      %s31 = int_to_ptr.vmem [resolvable:$true] %s30
      %36 = dma.hbm_to_vmem [thread:$0]  %s1, 512, %s31, [#allocation6], 128, 128, 8
    $region9: #{_stacked_mlp_pallas.1} parent=1 // pred_fallthru
      _
    // Predicated region
    $region10: #{_stacked_mlp_pallas.1} parent=1 // pred_check
      _
    $region11: #{_stacked_mlp_pallas.1} parent=1 // pred_check_branch
      %38 = sbr.rel (0) target = $region13
    $region12: #{_stacked_mlp_pallas.1} parent=1 // pred_region
      _
    $region13: #{_stacked_mlp_pallas.1} parent=1 // pred_fallthru
      _
    // Predicated region
    $region14: #{_stacked_mlp_pallas.1} parent=1 // pred_check
      _
    $region15: #{_stacked_mlp_pallas.1} parent=1 // pred_check_branch
      %40 = sbr.rel (0) target = $region17
    $region16: #{_stacked_mlp_pallas.1} parent=1 // pred_region
      %s42 = ssub.s32 2048, 2048
      %43 = vsyncadd [#allocation6], %s42
      %s44 = sshll.u32 [#allocation7], 4
      %s45 = int_to_ptr.vmem [resolvable:$true] %s44
      %50 = dma.hbm_to_vmem [thread:$0]  %s3, 2048, %s45, [#allocation6], 64, 64, 4
    $region17: #{_stacked_mlp_pallas.1} parent=1 // pred_fallthru
      _
    // Predicated region
    $region18: #{_stacked_mlp_pallas.1} parent=1 // pred_check
      _
    $region19: #{_stacked_mlp_pallas.1} parent=1 // pred_check_branch
      %52 = sbr.rel (0) target = $region21
    $region20: #{_stacked_mlp_pallas.1} parent=1 // pred_region
      _
    $region21: #{_stacked_mlp_pallas.1} parent=1 // pred_fallthru
      _
    // Predicated region
    $region22: #{_stacked_mlp_pallas.1} parent=1 // pred_check
      _
    $region23: #{_stacked_mlp_pallas.1} parent=1 // pred_check_branch
      %54 = sbr.rel (0) target = $region25
    $region24: #{_stacked_mlp_pallas.1} parent=1 // pred_region
      %55 = dma.done [#allocation3], 128
    $region25: #{_stacked_mlp_pallas.1} parent=1 // pred_fallthru
      _
    // Predicated region
    $region26: #{_stacked_mlp_pallas.1} parent=1 // pred_check
      _
    $region27: #{_stacked_mlp_pallas.1} parent=1 // pred_check_branch
      %57 = sbr.rel (0) target = $region29
    $region28: #{_stacked_mlp_pallas.1} parent=1 // pred_region
      %58 = dma.done [#allocation6], 512
    $region29: #{_stacked_mlp_pallas.1} parent=1 // pred_fallthru
      _
    // Predicated region
    $region30: #{_stacked_mlp_pallas.1} parent=1 // pred_check
      _
    $region31: #{_stacked_mlp_pallas.1} parent=1 // pred_check_branch
      %60 = sbr.rel (0) target = $region33
    $region32: #{_stacked_mlp_pallas.1} parent=1 // pred_region
      %61 = dma.done [#allocation6], 2048
    $region33: #{_stacked_mlp_pallas.1} parent=1 // pred_fallthru
      _
    %v63 = vld [vmem:[#allocation2] sm:$0xf]
    %v64 = vld [vmem:[#allocation2 + $0x4] sm:$0xf]
    %v65 = vld [vmem:[#allocation5] sm:$0xff]
    %v66 = vld [vmem:[#allocation5 + $0x8] sm:$0xff]
    %v67 = vld [vmem:[#allocation5 + $0x10] sm:$0xff]
    %v68 = vld [vmem:[#allocation5 + $0x18] sm:$0xff]
    %v69 = vld [vmem:[%s2] sm:$0x3]
    %v71 = vlaneseq
    %v72 = vshrl.u32 %v71, 7
    %v73 = vsub.s32 0, %v72
    %v74 = vrot.slane %v69, %v73
    %v75 = vlaneseq
    %v76 = vshrl.u32 %v75, 7
    %v77 = vsub.s32 1, %v76
    %v78 = vrot.slane %v69, %v77
    %v83 = vunpack.c.l.b16 %v63
    %v84 = vunpack.c.l.b16 %v64
    %v85 = vpack.c.b16 %v84, %v83
    %v90 = vunpack.c.l.b16 %v65
    %v91 = vunpack.c.h.b16 %v65
    %v92 = vunpack.c.l.b16 %v66
    %v93 = vunpack.c.h.b16 %v66
    %v94 = vunpack.c.l.b16 %v67
    %v95 = vunpack.c.h.b16 %v67
    %v96 = vunpack.c.l.b16 %v68
    %v97 = vunpack.c.h.b16 %v68
    %v98 = vpack.c.b16 %v92, %v90
    %v99 = vpack.c.b16 %v93, %v91
    %v100 = vpack.c.b16 %v96, %v94
    %v101 = vpack.c.b16 %v97, %v95
    %vm106 = vcmask 261120
    %v108 = vsel %vm106, %v85, 0
    %110 = vmatprep.subr.bf16.mxu0 %v99
    %111 = vmatpush1.bf16.msra.mxu0 %v98
    %112 = vmatprep.subr.bf16.mxu0 %v101
    %113 = vmatpush1.bf16.msra.mxu0 %v100
    %114 = vmatprep.subr.bf16.mxu0 0
    %115 = vmatpush1.bf16.msra.mxu0 0
    %116 = vmatprep.subr.bf16.mxu0 0
    %117 = vmatpush1.bf16.msra.mxu0 0
    %118 = vmatprep.subr.bf16.mxu0 0
    %119 = vmatpush1.bf16.msra.mxu0 0
    %120 = vmatprep.subr.bf16.mxu0 0
    %121 = vmatpush1.bf16.msra.mxu0 0
    %122 = vmatprep.subr.bf16.mxu0 0
    %123 = vmatpush1.bf16.msra.mxu0 0
    %124 = vmatprep.subr.bf16.mxu0 0
    %125 = vmatpush1.bf16.msra.mxu0 0
    %126 = vmatprep.subr.bf16.mxu0 0
    %127 = vmatpush1.bf16.msra.mxu0 0
    %128 = vmatprep.subr.bf16.mxu0 0
    %129 = vmatpush1.bf16.msra.mxu0 0
    %130 = vmatprep.subr.bf16.mxu0 0
    %131 = vmatpush1.bf16.msra.mxu0 0
    %132 = vmatprep.subr.bf16.mxu0 0
    %133 = vmatpush1.bf16.msra.mxu0 0
    %134 = vmatprep.subr.bf16.mxu0 0
    %135 = vmatpush1.bf16.msra.mxu0 0
    %136 = vmatprep.subr.bf16.mxu0 0
    %137 = vmatpush1.bf16.msra.mxu0 0
    %138 = vmatprep.subr.bf16.mxu0 0
    %139 = vmatpush1.bf16.msra.mxu0 0
    %140 = vmatprep.subr.bf16.mxu0 0
    %141 = vmatpush1.bf16.msra.mxu0 0
    %142 = vmatprep.mubr.bf16.mxu0 0
    %143 = vmatmul.mubr.bf16.gmra.mrb[0].mxu0 %v108
    %v144 = vpop.f32.mrb[0].mxu0
    %v145 = vadd.f32 %v74, %v144
    %v146 = vpop.f32.mrb[0].mxu0
    %v147 = vadd.f32 %v78, %v146
    %v148 = vpop.f32.mrb[0].mxu0
    %v149 = vadd.f32 %v74, %v148
    %v150 = vpop.f32.mrb[0].mxu0
    %v151 = vadd.f32 %v78, %v150
    %152 = vdwg.mxu0
    %v153 = vmax.f32 %v145, 0.0
    %v154 = vmax.f32 %v147, 0.0
    %v155 = vmax.f32 %v149, 0.0
    %v156 = vmax.f32 %v151, 0.0
    %v157 = vpack.c.bf16 %v155, %v153
    %v158 = vpack.c.bf16 %v156, %v154
    %v159 = vld [vmem:[#allocation7] sm:$0xf]
    %v160 = vld [vmem:[#allocation7 + $0x4] sm:$0xf]
    %v161 = vld [vmem:[#allocation7 + $0x8] sm:$0xf]
    %v162 = vld [vmem:[#allocation7 + $0xc] sm:$0xf]
    %v163 = vld [vmem:[#allocation7 + $0x10] sm:$0xf]
    %v164 = vld [vmem:[#allocation7 + $0x14] sm:$0xf]
    %v165 = vld [vmem:[#allocation7 + $0x18] sm:$0xf]
    %v166 = vld [vmem:[#allocation7 + $0x1c] sm:$0xf]
    %v167 = vld [vmem:[#allocation7 + $0x20] sm:$0xf]
    %v168 = vld [vmem:[#allocation7 + $0x24] sm:$0xf]
    %v169 = vld [vmem:[#allocation7 + $0x28] sm:$0xf]
    %v170 = vld [vmem:[#allocation7 + $0x2c] sm:$0xf]
    %v171 = vld [vmem:[#allocation7 + $0x30] sm:$0xf]
    %v172 = vld [vmem:[#allocation7 + $0x34] sm:$0xf]
    %v173 = vld [vmem:[#allocation7 + $0x38] sm:$0xf]
    %v174 = vld [vmem:[#allocation7 + $0x3c] sm:$0xf]
    %v175 = vld [vmem:[#allocation7 + $0x40] sm:$0xf]
    %v176 = vld [vmem:[#allocation7 + $0x44] sm:$0xf]
    %v177 = vld [vmem:[#allocation7 + $0x48] sm:$0xf]
    %v178 = vld [vmem:[#allocation7 + $0x4c] sm:$0xf]
    %v179 = vld [vmem:[#allocation7 + $0x50] sm:$0xf]
    %v180 = vld [vmem:[#allocation7 + $0x54] sm:$0xf]
    %v181 = vld [vmem:[#allocation7 + $0x58] sm:$0xf]
    %v182 = vld [vmem:[#allocation7 + $0x5c] sm:$0xf]
    %v183 = vld [vmem:[#allocation7 + $0x60] sm:$0xf]
    %v184 = vld [vmem:[#allocation7 + $0x64] sm:$0xf]
    %v185 = vld [vmem:[#allocation7 + $0x68] sm:$0xf]
    %v186 = vld [vmem:[#allocation7 + $0x6c] sm:$0xf]
    %v187 = vld [vmem:[#allocation7 + $0x70] sm:$0xf]
    %v188 = vld [vmem:[#allocation7 + $0x74] sm:$0xf]
    %v189 = vld [vmem:[#allocation7 + $0x78] sm:$0xf]
    %v190 = vld [vmem:[#allocation7 + $0x7c] sm:$0xf]
    %v191 = vld [vmem:[%s4] sm:$0x1]
    %v193 = vlaneseq
    %v194 = vshrl.u32 %v193, 7
    %v195 = vsub.s32 0, %v194
    %v196 = vrot.slane %v191, %v195
    %v230 = vunpack.c.l.b16 %v159
    %v231 = vunpack.c.l.b16 %v160
    %v232 = vunpack.c.l.b16 %v161
    %v233 = vunpack.c.l.b16 %v162
    %v234 = vunpack.c.l.b16 %v163
    %v235 = vunpack.c.l.b16 %v164
    %v236 = vunpack.c.l.b16 %v165
    %v237 = vunpack.c.l.b16 %v166
    %v238 = vunpack.c.l.b16 %v167
    %v239 = vunpack.c.l.b16 %v168
    %v240 = vunpack.c.l.b16 %v169
    %v241 = vunpack.c.l.b16 %v170
    %v242 = vunpack.c.l.b16 %v171
    %v243 = vunpack.c.l.b16 %v172
    %v244 = vunpack.c.l.b16 %v173
    %v245 = vunpack.c.l.b16 %v174
    %v246 = vunpack.c.l.b16 %v175
    %v247 = vunpack.c.l.b16 %v176
    %v248 = vunpack.c.l.b16 %v177
    %v249 = vunpack.c.l.b16 %v178
    %v250 = vunpack.c.l.b16 %v179
    %v251 = vunpack.c.l.b16 %v180
    %v252 = vunpack.c.l.b16 %v181
    %v253 = vunpack.c.l.b16 %v182
    %v254 = vunpack.c.l.b16 %v183
    %v255 = vunpack.c.l.b16 %v184
    %v256 = vunpack.c.l.b16 %v185
    %v257 = vunpack.c.l.b16 %v186
    %v258 = vunpack.c.l.b16 %v187
    %v259 = vunpack.c.l.b16 %v188
    %v260 = vunpack.c.l.b16 %v189
    %v261 = vunpack.c.l.b16 %v190
    %v262 = vpack.c.b16 %v231, %v230
    %v263 = vpack.c.b16 %v233, %v232
    %v264 = vpack.c.b16 %v235, %v234
    %v265 = vpack.c.b16 %v237, %v236
    %v266 = vpack.c.b16 %v239, %v238
    %v267 = vpack.c.b16 %v241, %v240
    %v268 = vpack.c.b16 %v243, %v242
    %v269 = vpack.c.b16 %v245, %v244
    %v270 = vpack.c.b16 %v247, %v246
    %v271 = vpack.c.b16 %v249, %v248
    %v272 = vpack.c.b16 %v251, %v250
    %v273 = vpack.c.b16 %v253, %v252
    %v274 = vpack.c.b16 %v255, %v254
    %v275 = vpack.c.b16 %v257, %v256
    %v276 = vpack.c.b16 %v259, %v258
    %v277 = vpack.c.b16 %v261, %v260
    %294 = vmatprep.subr.bf16.mxu0 0
    %295 = vmatpush1.bf16.msra.mxu0 %v262
    %296 = vmatprep.subr.bf16.mxu0 0
    %297 = vmatpush1.bf16.msra.mxu0 %v263
    %298 = vmatprep.subr.bf16.mxu0 0
    %299 = vmatpush1.bf16.msra.mxu0 %v264
    %300 = vmatprep.subr.bf16.mxu0 0
    %301 = vmatpush1.bf16.msra.mxu0 %v265
    %302 = vmatprep.subr.bf16.mxu0 0
    %303 = vmatpush1.bf16.msra.mxu0 %v266
    %304 = vmatprep.subr.bf16.mxu0 0
    %305 = vmatpush1.bf16.msra.mxu0 %v267
    %306 = vmatprep.subr.bf16.mxu0 0
    %307 = vmatpush1.bf16.msra.mxu0 %v268
    %308 = vmatprep.subr.bf16.mxu0 0
    %309 = vmatpush1.bf16.msra.mxu0 %v269
    %310 = vmatprep.subr.bf16.mxu0 0
    %311 = vmatpush1.bf16.msra.mxu0 %v270
    %312 = vmatprep.subr.bf16.mxu0 0
    %313 = vmatpush1.bf16.msra.mxu0 %v271
    %314 = vmatprep.subr.bf16.mxu0 0
    %315 = vmatpush1.bf16.msra.mxu0 %v272
    %316 = vmatprep.subr.bf16.mxu0 0
    %317 = vmatpush1.bf16.msra.mxu0 %v273
    %318 = vmatprep.subr.bf16.mxu0 0
    %319 = vmatpush1.bf16.msra.mxu0 %v274
    %320 = vmatprep.subr.bf16.mxu0 0
    %321 = vmatpush1.bf16.msra.mxu0 %v275
    %322 = vmatprep.subr.bf16.mxu0 0
    %323 = vmatpush1.bf16.msra.mxu0 %v276
    %324 = vmatprep.subr.bf16.mxu0 0
    %325 = vmatpush1.bf16.msra.mxu0 %v277
    %326 = vmatprep.mubr.bf16.mxu0 %v158
    %327 = vmatmul.mubr.bf16.gmra.mrb[0].mxu0 %v157
    %v328 = vpop.f32.mrb[0].mxu0
    %v329 = vadd.f32 %v196, %v328
    %v330 = vpop.f32.mrb[0].mxu0
    %v331 = vpop.f32.mrb[0].mxu0
    %v332 = vadd.f32 %v196, %v331
    %v333 = vpop.f32.mrb[0].mxu0
    %334 = vdwg.mxu0
    %335 = vst [vmem:[#allocation8] sm:$0xff] %v329
    %336 = vst [vmem:[#allocation8 + $0x8] sm:$0xff] %v332
    // Predicated region
    $region34: #{_stacked_mlp_pallas.1} parent=1 // pred_check
      _
    $region35: #{_stacked_mlp_pallas.1} parent=1 // pred_check_branch
      %338 = sbr.rel (0) target = $region37
    $region36: #{_stacked_mlp_pallas.1} parent=1 // pred_region
      %s340 = ssub.s32 256, 256
      %341 = vsyncadd [#allocation4], %s340
      %s342 = sshll.u32 [#allocation8], 4
      %s343 = int_to_ptr.vmem [resolvable:$true] %s342
      %348 = dma.vmem_to_hbm [thread:$0]  %s343, 256, %s5, [#allocation4], 128, 128, 8
    $region37: #{_stacked_mlp_pallas.1} parent=1 // pred_fallthru
      _
    // Predicated region
    $region38: #{_stacked_mlp_pallas.1} parent=1 // pred_check
      _
    $region39: #{_stacked_mlp_pallas.1} parent=1 // pred_check_branch
      %350 = sbr.rel (0) target = $region41
    $region40: #{_stacked_mlp_pallas.1} parent=1 // pred_region
      %351 = dma.done [#allocation4], 256
    $region41: #{_stacked_mlp_pallas.1} parent=1 // pred_fallthru
      _
    %352 = vsyncpa [#allocation3], 1
    %353 = vsyncpa [#allocation6], 1
    %354 = vsyncpa [#allocation4], 1

</llo_original>
